<compile_context>
chip_gen: v7x
topology: tpu7x:2x2x1
jax: 0.10.0
libtpu: 0.0.40
codegen_flags: <defaults>
</compile_context>

<pallas_src>
import functools

import jax
import jax.numpy as jnp
from jax.experimental import pallas as pl
from jax.experimental.pallas import tpu as pltpu

VMEM_SPEC = pl.BlockSpec(memory_space=pltpu.MemorySpace.VMEM)
SMEM_SPEC = pl.BlockSpec(memory_space=pltpu.MemorySpace.SMEM)


# ----------------------------------------------------------------------------
# Kernel 1: per-frame dense features (net_frame linear layer), batched over N
# ----------------------------------------------------------------------------
def _frame_dense_kernel(x_ref, w_ref, b_ref, o_ref):
    o_ref[...] = jnp.dot(x_ref[...], w_ref[...],
                         preferred_element_type=jnp.float32) + b_ref[...]


# ----------------------------------------------------------------------------
# Kernel 2: fused per-pixel pipeline
#   preprocess -> sound MLP -> synthesizer (+sigmoid) -> weighted BCE
# ----------------------------------------------------------------------------
def _fused_pixel_kernel(w1_ref, b1_ref, v_ref, c_ref,             # SMEM scalars
                        mag_mix_ref, mags_ref,                     # VMEM tiles
                        mm_out, w_out, gt_out, pred_out, err_out,  # outputs
                        *, hidden, num_mix, scale, bias,
                        weighted_loss, binary_mask, inv_denom):
    b = pl.program_id(0)
    fi = pl.program_id(1)

    @pl.when((b == 0) & (fi == 0))
    def _init():
        err_out[...] = jnp.zeros_like(err_out)

    mm = mag_mix_ref[0] + 1e-10                       # (f_tile, T)
    mm_out[0] = mm
    if weighted_loss:
        wgt = jnp.clip(jnp.log1p(mm), 0.001, 10.0)
    else:
        wgt = jnp.ones_like(mm)
    w_out[0] = wgt

    x = jnp.log(mm)                                   # log(mag_mix) tile

    # Fused sound-MLP + synthesizer K-contraction: lane-dense VPU FMAs.
    accs = [jnp.zeros_like(x) for _ in range(num_mix)]
    for h in range(hidden):
        r = jnp.maximum(w1_ref[h] * x + b1_ref[h], 0.0)
        for n in range(num_mix):
            accs[n] = accs[n] + v_ref[b * num_mix + n, h] * r

    tile_loss = 0.0
    for n in range(num_mix):
        pred = jax.nn.sigmoid(scale * (accs[n] + c_ref[b, n]) + bias)
        pred_out[n, 0] = pred
        if binary_mask:
            gt = (mags_ref[n, 0] > 0.5 * mm).astype(jnp.float32)
        else:
            gt = jnp.clip(mags_ref[n, 0] / mm, 0.0, 5.0)
        gt_out[n, 0] = gt
        p = jnp.clip(pred, 1e-7, 1.0 - 1e-7)
        bce = -(gt * jnp.log(p) + (1.0 - gt) * jnp.log1p(-p))
        tile_loss = tile_loss + jnp.sum(wgt * bce)

    # Loss accumulator: (1,1) output block with constant index stays VMEM-resident.
    err_out[...] = err_out[...] + tile_loss * inv_denom


# ----------------------------------------------------------------------------
# Wrappers
# ----------------------------------------------------------------------------
def _choose_f_tile(F_, T, num_mix, budget_bytes=4 * 1024 * 1024):
    """Largest F-tile (divisor of F, multiple of 8) whose double-buffered
    per-step working set (1+N input + 2+2N output slabs) fits the budget."""
    if F_ % 8 != 0:
        return F_                       # full-F block is always legal
    slabs = 2 * (3 + 3 * num_mix)
    f_tile = F_
    while f_tile % 16 == 0 and f_tile * T * 4 * slabs > budget_bytes:
        f_tile //= 2
    return f_tile


def frame_features_pallas(frames, params):
    """net_frame.forward_multiframe for all N mixtures in one batched call."""
    N, B, C, Tf, H, W = frames.shape
    D = C * H * W
    K = params['frm_w'].shape[1]
    x = frames.transpose(0, 1, 3, 2, 4, 5).reshape(N * B * Tf, D)
    y = pl.pallas_call(
        _frame_dense_kernel,
        out_shape=jax.ShapeDtypeStruct((N * B * Tf, K), jnp.float32),
        in_specs=[VMEM_SPEC] * 3,
        out_specs=VMEM_SPEC,
    )(x, params['frm_w'], params['frm_b'])
    return jnp.max(y.reshape(N, B, Tf, K), axis=2)     # temporal max-pool -> (N, B, K)


def fused_pixel_forward(mag_mix, mags, feat_img, params, args):
    B, _, F_, T = mag_mix.shape
    N = args.num_mix
    hidden = params['snd_w1'].shape[1]

    # Fold sound-MLP layer-2 + synthesizer K-contraction into per-(n,b) vectors
    # (tiny (N,B,hidden) / (N,B) tensors -> SMEM operands).
    v = jnp.einsum('nbk,hk->nbh', feat_img, params['snd_w2'])     # (N, B, hidden)
    c = jnp.einsum('nbk,k->nb', feat_img, params['snd_b2'][0])    # (N, B)
    v_flat = v.transpose(1, 0, 2).reshape(B * N, hidden)          # row = b*N + n
    c_bn = jnp.transpose(c)                                       # (B, N)
    w1 = params['snd_w1'].reshape(hidden)
    b1 = params['snd_b1'].reshape(hidden)

    f_tile = _choose_f_tile(F_, T, N)
    grid = (B, F_ // f_tile)
    inv_denom = 1.0 / float(N * B * F_ * T)

    kernel = functools.partial(
        _fused_pixel_kernel, hidden=hidden, num_mix=N,
        scale=float(params['syn_scale']), bias=float(params['syn_bias']),
        weighted_loss=args.weighted_loss, binary_mask=args.binary_mask,
        inv_denom=inv_denom)

    mm_out, weight_out, gt_out, pred_out, err = pl.pallas_call(
        kernel,
        grid=grid,
        in_specs=[SMEM_SPEC, SMEM_SPEC, SMEM_SPEC, SMEM_SPEC,
                  pl.BlockSpec((1, f_tile, T), lambda b, f: (b, f, 0)),
                  pl.BlockSpec((N, 1, f_tile, T), lambda b, f: (0, b, f, 0))],
        out_specs=(pl.BlockSpec((1, f_tile, T), lambda b, f: (b, f, 0)),
                   pl.BlockSpec((1, f_tile, T), lambda b, f: (b, f, 0)),
                   pl.BlockSpec((N, 1, f_tile, T), lambda b, f: (0, b, f, 0)),
                   pl.BlockSpec((N, 1, f_tile, T), lambda b, f: (0, b, f, 0)),
                   pl.BlockSpec((1, 1), lambda b, f: (0, 0))),
        out_shape=(jax.ShapeDtypeStruct((B, F_, T), jnp.float32),
                   jax.ShapeDtypeStruct((B, F_, T), jnp.float32),
                   jax.ShapeDtypeStruct((N, B, F_, T), jnp.float32),
                   jax.ShapeDtypeStruct((N, B, F_, T), jnp.float32),
                   jax.ShapeDtypeStruct((1, 1), jnp.float32)),
        compiler_params=pltpu.CompilerParams(
            dimension_semantics=("arbitrary", "arbitrary"),
            vmem_limit_bytes=32 * 1024 * 1024),
    )(w1, b1, v_flat, c_bn,
      mag_mix.reshape(B, F_, T), mags.reshape(N, B, F_, T))

    return (err.reshape(1),
            mm_out.reshape(B, 1, F_, T),
            weight_out.reshape(B, 1, F_, T),
            gt_out.reshape(N, B, 1, F_, T),
            pred_out.reshape(N, B, 1, F_, T))


# ----------------------------------------------------------------------------
# NetWrapper forward
# ----------------------------------------------------------------------------
class Args:
    num_mix = 2
    log_freq = False          # TODO(synk): grid_sample warp path not implemented
    weighted_loss = True
    binary_mask = True
    sound_activation = 'no'
    img_activation = 'sigmoid'
    output_activation = 'sigmoid'   # fused into the pixel kernel


def activate(x, kind):
    if kind == 'sigmoid':
        return jax.nn.sigmoid(x)
    if kind == 'relu':
        return jnp.maximum(x, 0.0)
    if kind == 'tanh':
        return jnp.tanh(x)
    return x  # 'no'


def net_wrapper_forward(batch_data, params, args):
    mag_mix = batch_data['mag_mix']          # (B, 1, F, T)
    mags = batch_data['mags']                # (N, B, 1, F, T)
    frames = batch_data['frames']            # (N, B, C, Tf, H, W)

    if args.sound_activation != 'no':
        # TODO(synk): a non-identity sound_activation breaks the analytic
        #             K-contraction fold; reference config uses 'no'.
        raise NotImplementedError("fused kernel assumes sound_activation == 'no'")

    # Frame features for all N mixtures in one batched kernel, then pool + activate.
    feat_img = activate(frame_features_pallas(frames, params),
                        args.img_activation)               # (N, B, K)

    # (log_freq warp skipped; args.log_freq == False)
    err, mag_mix_p, weight, gt_masks, pred_masks = fused_pixel_forward(
        mag_mix, mags, feat_img, params, args)

    # Note: like the PyTorch reference, the returned mag_mix includes the +1e-10.
    return err, {'pred_masks': pred_masks, 'gt_masks': gt_masks,
                 'mag_mix': mag_mix_p, 'mags': mags, 'weight': weight}


# ----------------------------------------------------------------------------
# Deterministic parameter init
# ----------------------------------------------------------------------------
def init_params(key, *, C=3, H=8, W=8, hidden=32, K=16):
    D = C * H * W
    k1, k2, k3 = jax.random.split(key, 3)
    return {
        'snd_w1': jax.random.normal(k1, (1, hidden), jnp.float32) * 0.5,
        'snd_b1': jnp.zeros((1, hidden), jnp.float32),
        'snd_w2': jax.random.normal(k2, (hidden, K), jnp.float32) / jnp.sqrt(hidden),
        'snd_b2': jnp.zeros((1, K), jnp.float32),
        'frm_w': jax.random.normal(k3, (D, K), jnp.float32) / jnp.sqrt(D),
        'frm_b': jnp.zeros((1, K), jnp.float32),
        'syn_scale': 1.0,
        'syn_bias': 0.0,
    }


if __name__ == "__main__":
    key = jax.random.PRNGKey(0)
    km, kf, kp = jax.random.split(key, 3)

    B, F_, T = 2, 16, 16
    N, C, Tf, H, W = 2, 3, 3, 8, 8
    args = Args()
    params = init_params(kp, C=C, H=H, W=W, hidden=32, K=16)

    # STFT-magnitude-like nonnegative inputs; mixture = sum of sources
    mags = jnp.abs(jax.random.normal(km, (N, B, 1, F_, T), jnp.float32))
    mag_mix = jnp.sum(mags, axis=0)
    frames = jax.random.normal(kf, (N, B, C, Tf, H, W), jnp.float32)

    batch_data = {'mag_mix': mag_mix, 'mags': mags, 'frames': frames}
    err, outputs = net_wrapper_forward(batch_data, params, args)
    jax.block_until_ready((err, outputs))
    assert err.shape == (1,)
    assert outputs['pred_masks'].shape == (N, B, 1, F_, T)
    print("KERNEL_OK")
</pallas_src>

<mosaic_0001>
module attributes {stable_mosaic.version = 11 : i64} {
  func.func @_frame_dense_kernel(%arg0: memref<12x192xf32, #tpu.memory_space<vmem>>, %arg1: memref<192x16xf32, #tpu.memory_space<vmem>>, %arg2: memref<1x16xf32, #tpu.memory_space<vmem>>, %arg3: memref<12x16xf32, #tpu.memory_space<vmem>>) attributes {dimension_semantics = [], scalar_prefetch = 0 : i64, scratch_operands = 0 : i64, tpu.core_type = #tpu.core_type<tc>} {
    %c0 = arith.constant 0 : index
    %c0_0 = arith.constant 0 : index
    %0 = vector.load %arg0[%c0, %c0_0] : memref<12x192xf32, #tpu.memory_space<vmem>>, vector<12x192xf32>
    %c0_1 = arith.constant 0 : index
    %c0_2 = arith.constant 0 : index
    %1 = vector.load %arg1[%c0_1, %c0_2] : memref<192x16xf32, #tpu.memory_space<vmem>>, vector<192x16xf32>
    %cst = arith.constant dense<0.000000e+00> : vector<12x16xf32>
    %2 = tpu.matmul %0, %1, %cst {dimension_numbers = #tpu.dot_dimension_numbers<[1], [0], [0], [1], [0, 0, 1, 1], [], []>} : vector<12x192xf32>, vector<192x16xf32>, vector<12x16xf32> -> vector<12x16xf32>
    %c0_3 = arith.constant 0 : index
    %c0_4 = arith.constant 0 : index
    %3 = vector.load %arg2[%c0_3, %c0_4] : memref<1x16xf32, #tpu.memory_space<vmem>>, vector<1x16xf32>
    %4 = vector.broadcast %3 : vector<1x16xf32> to vector<12x16xf32>
    %5 = arith.addf %2, %4 : vector<12x16xf32>
    %c0_5 = arith.constant 0 : index
    %c0_6 = arith.constant 0 : index
    %6 = vector.load %arg3[%c0_5, %c0_6] : memref<12x16xf32, #tpu.memory_space<vmem>>, vector<12x16xf32>
    tpu.vector_store %arg3[%c0_5, %c0_6], %5 {strides = array<i32>} : memref<12x16xf32, #tpu.memory_space<vmem>>, vector<12x16xf32>,
    return
  }
}

</mosaic_0001>

<llo_original>
// kernel: tpu_custom_call.1
$region0: #{tpu_custom_call.1}
  #allocation0 [shape = 'u32[]', space=smem, size = 0x4, offset = 0x4, fixed_abs, tag = 'smem constant byte address 0x4 - core index']
  #allocation1 [shape = 'u32[144,128]{1,0:T(1,128)}', space=vmem, size = 0x12000, scoped, tag = 'internal scratch']
  %s0 = inlined_call_operand.vmem [shape: f32[12,192], index: 0, kind: input, shape index: {}]
  %s1 = inlined_call_operand.vmem [shape: f32[192,16], index: 1, kind: input, shape index: {}]
  %s2 = inlined_call_operand.vmem [shape: f32[1,16], index: 2, kind: input, shape index: {}]
  %s3 = inlined_call_operand.hbm [shape: f32[12,16], index: 3, kind: output, shape index: {}]
  %s4 = sld [smem:[#allocation0]]
  $region22: #{tpu_custom_call.1} parent=0
    _
  %s6 = ssub.s32 1, %s4
  %s7 = scalar_select 0, %s6, %s4
  $region1: #{tpu_custom_call.1} parent=0
    #allocation2 [shape = 'u8[8192]{0}', space=vmem, size = 0x2000, scoped, tag = 'output window, operand 0, single buffered']
    #allocation3 [shape = 's32[1]{0}', space=sflag, size = 0x4, scoped, tag = 'scoped memory for tpu_custom_call.1']
    %8 = vsyncpa [#allocation3], 0
    // Predicated region
    $region2: #{tpu_custom_call.1} parent=1 // pred_check
      _
    $region3: #{tpu_custom_call.1} parent=1 // pred_check_branch
      %10 = sbr.rel (0) target = $region5
    $region4: #{tpu_custom_call.1} parent=1 // pred_region
      _
    $region5: #{tpu_custom_call.1} parent=1 // pred_fallthru
      _
    // Predicated region
    $region6: #{tpu_custom_call.1} parent=1 // pred_check
      _
    $region7: #{tpu_custom_call.1} parent=1 // pred_check_branch
      %12 = sbr.rel (0) target = $region9
    $region8: #{tpu_custom_call.1} parent=1 // pred_region
      _
    $region9: #{tpu_custom_call.1} parent=1 // pred_fallthru
      _
    // Predicated region
    $region10: #{tpu_custom_call.1} parent=1 // pred_check
      _
    $region11: #{tpu_custom_call.1} parent=1 // pred_check_branch
      %14 = sbr.rel (0) target = $region13
    $region12: #{tpu_custom_call.1} parent=1 // pred_region
      _
    $region13: #{tpu_custom_call.1} parent=1 // pred_fallthru
      _
    %v15 = vld [vmem:[%s0] sm:$0xff]
    %v16 = vld [vmem:[%s0 + $0x8] sm:$0xff]
    %v17 = vld [vmem:[%s0 + $0x10] sm:$0xf]
    %v18 = vld [vmem:[%s0 + $0x18] sm:$0xf]
    %v19 = vld [vmem:[%s1] sm:$0xff]
    %v20 = vld [vmem:[%s1 + $0x8] sm:$0xff]
    %v21 = vld [vmem:[%s1 + $0x10] sm:$0xff]
    %v22 = vld [vmem:[%s1 + $0x18] sm:$0xff]
    %v23 = vld [vmem:[%s1 + $0x20] sm:$0xff]
    %v24 = vld [vmem:[%s1 + $0x28] sm:$0xff]
    %v25 = vld [vmem:[%s1 + $0x30] sm:$0xff]
    %v26 = vld [vmem:[%s1 + $0x38] sm:$0xff]
    %v27 = vld [vmem:[%s1 + $0x40] sm:$0xff]
    %v28 = vld [vmem:[%s1 + $0x48] sm:$0xff]
    %v29 = vld [vmem:[%s1 + $0x50] sm:$0xff]
    %v30 = vld [vmem:[%s1 + $0x58] sm:$0xff]
    %v31 = vld [vmem:[%s1 + $0x60] sm:$0xff]
    %v32 = vld [vmem:[%s1 + $0x68] sm:$0xff]
    %v33 = vld [vmem:[%s1 + $0x70] sm:$0xff]
    %v34 = vld [vmem:[%s1 + $0x78] sm:$0xff]
    %v35 = vld [vmem:[%s1 + $0x80] sm:$0xff]
    %v36 = vld [vmem:[%s1 + $0x88] sm:$0xff]
    %v37 = vld [vmem:[%s1 + $0x90] sm:$0xff]
    %v38 = vld [vmem:[%s1 + $0x98] sm:$0xff]
    %v39 = vld [vmem:[%s1 + $0xa0] sm:$0xff]
    %v40 = vld [vmem:[%s1 + $0xa8] sm:$0xff]
    %v41 = vld [vmem:[%s1 + $0xb0] sm:$0xff]
    %v42 = vld [vmem:[%s1 + $0xb8] sm:$0xff]
    %v43 = vld [vmem:[%s2] sm:$0x1]
    %v45 = vlaneseq
    %v46 = vshrl.u32 %v45, 7
    %v47 = vsub.s32 0, %v46
    %v48 = vrot.slane %v43, %v47
    %vm50 = vcmask 523264
    %v52 = vsel %vm50, %v16, 0
    %v55 = vsel %vm50, %v18, 0
    %57 = vmatprep.subr.mxu0 0.0
    %58 = vmatpush1.msra.mxu0 %v19
    %59 = vmatprep.subr.mxu0 0.0
    %60 = vmatpush1.msra.mxu0 %v20
    %61 = vmatprep.subr.mxu0 0.0
    %62 = vmatpush1.msra.mxu0 %v21
    %63 = vmatprep.subr.mxu0 0.0
    %64 = vmatpush1.msra.mxu0 %v22
    %65 = vmatprep.subr.mxu0 0.0
    %66 = vmatpush1.msra.mxu0 %v23
    %67 = vmatprep.subr.mxu0 0.0
    %68 = vmatpush1.msra.mxu0 %v24
    %69 = vmatprep.subr.mxu0 0.0
    %70 = vmatpush1.msra.mxu0 %v25
    %71 = vmatprep.subr.mxu0 0.0
    %72 = vmatpush1.msra.mxu0 %v26
    %73 = vmatprep.subr.mxu0 0.0
    %74 = vmatpush1.msra.mxu0 %v27
    %75 = vmatprep.subr.mxu0 0.0
    %76 = vmatpush1.msra.mxu0 %v28
    %77 = vmatprep.subr.mxu0 0.0
    %78 = vmatpush1.msra.mxu0 %v29
    %79 = vmatprep.subr.mxu0 0.0
    %80 = vmatpush1.msra.mxu0 %v30
    %81 = vmatprep.subr.mxu0 0.0
    %82 = vmatpush1.msra.mxu0 %v31
    %83 = vmatprep.subr.mxu0 0.0
    %84 = vmatpush1.msra.mxu0 %v32
    %85 = vmatprep.subr.mxu0 0.0
    %86 = vmatpush1.msra.mxu0 %v33
    %87 = vmatprep.subr.mxu0 0.0
    %88 = vmatpush1.msra.mxu0 %v34
    %89 = vmatprep.subr.mxu0 0.0
    %90 = vmatpush1.msra.mxu0 %v35
    %91 = vmatprep.subr.mxu0 0.0
    %92 = vmatpush1.msra.mxu0 %v36
    %93 = vmatprep.subr.mxu0 0.0
    %94 = vmatpush1.msra.mxu0 %v37
    %95 = vmatprep.subr.mxu0 0.0
    %96 = vmatpush1.msra.mxu0 %v38
    %97 = vmatprep.subr.mxu0 0.0
    %98 = vmatpush1.msra.mxu0 %v39
    %99 = vmatprep.subr.mxu0 0.0
    %100 = vmatpush1.msra.mxu0 %v40
    %101 = vmatprep.subr.mxu0 0.0
    %102 = vmatpush1.msra.mxu0 %v41
    %103 = vmatprep.subr.mxu0 0.0
    %104 = vmatpush1.msra.mxu0 %v42
    %105 = vmatprep.subr.mxu0 0.0
    %106 = vmatpush1.msra.mxu0 0.0
    %107 = vmatprep.subr.mxu0 0.0
    %108 = vmatpush1.msra.mxu0 0.0
    %109 = vmatprep.subr.mxu0 0.0
    %110 = vmatpush1.msra.mxu0 0.0
    %111 = vmatprep.subr.mxu0 0.0
    %112 = vmatpush1.msra.mxu0 0.0
    %113 = vmatprep.subr.mxu0 0.0
    %114 = vmatpush1.msra.mxu0 0.0
    %115 = vmatprep.subr.mxu0 0.0
    %116 = vmatpush1.msra.mxu0 0.0
    %117 = vmatprep.subr.mxu0 0.0
    %118 = vmatpush1.msra.mxu0 0.0
    %119 = vmatprep.subr.mxu0 0.0
    %120 = vmatpush1.msra.mxu0 0.0
    %121 = vmatprep.mubr.f32.mxu0 %v52
    %122 = vmatmul.mubr.f32.gmra.mrb[0].mxu0 %v15
    %v123 = vpop.f32.mrb[0].mxu0
    %v124 = vadd.f32 %v48, %v123
    %v125 = vpop.f32.mrb[0].mxu0
    %126 = vmatprep.mubr.f32.mxu0 %v55
    %127 = vmatmul.mubr.f32.gmra.mrb[0].mxu0 %v17
    %v128 = vpop.f32.mrb[0].mxu0
    %v129 = vadd.f32 %v48, %v128
    %v130 = vpop.f32.mrb[0].mxu0
    %131 = vdwg.mxu0
    %vm132 = vcmask 130048
    %133 = vst.msk [vmem:[#allocation2] sm:$0xff] %vm132, %v124
    %vm134 = vcmask 125952
    %135 = vst.msk [vmem:[#allocation2 + $0x8] sm:$0xf] %vm134, %v129
    // Predicated region
    $region14: #{tpu_custom_call.1} parent=1 // pred_check
      _
    $region15: #{tpu_custom_call.1} parent=1 // pred_check_branch
      %137 = sbr.rel (0) target = $region17
    $region16: #{tpu_custom_call.1} parent=1 // pred_region
      %s139 = ssub.s32 256, 256
      %140 = vsyncadd [#allocation3], %s139
      %s141 = sshll.u32 [#allocation2], 4
      %s142 = int_to_ptr.vmem [resolvable:$true] %s141
      %147 = dma.vmem_to_hbm [thread:$0]  %s142, 256, %s3, [#allocation3], 128, 128, 8
    $region17: #{tpu_custom_call.1} parent=1 // pred_fallthru
      _
    // Predicated region
    $region18: #{tpu_custom_call.1} parent=1 // pred_check
      _
    $region19: #{tpu_custom_call.1} parent=1 // pred_check_branch
      %149 = sbr.rel (0) target = $region21
    $region20: #{tpu_custom_call.1} parent=1 // pred_region
      %150 = dma.done [#allocation3], 256
    $region21: #{tpu_custom_call.1} parent=1 // pred_fallthru
      _
    %151 = vsyncpa [#allocation3], 1

</llo_original>
